<compile_context>
chip_gen: v7x
topology: tpu7x:2x2x1
jax: 0.10.0
libtpu: 0.0.40
codegen_flags: <defaults>
</compile_context>

<pallas_src>
import functools

import jax
import jax.numpy as jnp
import numpy as np
from jax.experimental import pallas as pl
from jax.experimental.pallas import tpu as pltpu


# ---------------------------------------------------------------------------
# Pallas kernel: (tile_m, tile_k) @ (tile_k, oc_pad) accumulated over the K
# grid axis into an f32 VMEM scratch, then fused BN scale/bias + ReLU.
# ---------------------------------------------------------------------------
def _matmul_bn_relu_kernel(x_ref, w_ref, scale_ref, bias_ref, o_ref, acc_ref):
    @pl.when(pl.program_id(1) == 0)
    def _init():
        acc_ref[...] = jnp.zeros_like(acc_ref)

    acc_ref[...] += jnp.dot(x_ref[...], w_ref[...],
                            preferred_element_type=jnp.float32)

    @pl.when(pl.program_id(1) == pl.num_programs(1) - 1)
    def _finalize():
        y = acc_ref[...] * scale_ref[...] + bias_ref[...]
        o_ref[...] = jnp.maximum(y, 0.0).astype(o_ref.dtype)


def _round_up(v, m):
    return (v + m - 1) // m * m


@functools.partial(
    jax.jit,
    static_argnames=("stride", "padding", "tile_m", "max_tile_k",
                     "lane_multiple", "compute_dtype"))
def conv_block_forward(x, conv_w, conv_b, bn_gamma, bn_beta, bn_mean, bn_var,
                       stride=1, padding=0, eps=1e-5,
                       tile_m=512, max_tile_k=512, lane_multiple=128,
                       compute_dtype=jnp.bfloat16):
    """ConvBlock forward. x: (N, C, H, W) float32 NCHW. Returns (N, OC, OH, OW)."""
    oc, ic, kh, kw = conv_w.shape
    n, c, h, w = x.shape
    assert c == ic

    # ---- glue: NHWC bf16 patches (im2col), weight / BN folding --------------
    x_nhwc = jnp.transpose(x, (0, 2, 3, 1)).astype(compute_dtype)
    patches = jax.lax.conv_general_dilated_patches(
        x_nhwc, (kh, kw), (stride, stride),
        ((padding, padding), (padding, padding)),
        dimension_numbers=("NHWC", "HWIO", "NHWC"))
    _, oh, ow, k = patches.shape              # k = C*KH*KW, channel-major (C,KH,KW)
    m = n * oh * ow
    x_col = patches.reshape(m, k)

    # Weight matrix (K, OC) in the same (C, KH, KW) ordering; lane-pad OC.
    oc_pad = _round_up(oc, lane_multiple)
    w_mat = conv_w.reshape(oc, ic * kh * kw).T.astype(compute_dtype)
    if oc_pad != oc:
        w_mat = jnp.pad(w_mat, ((0, 0), (0, oc_pad - oc)))

    # Fold conv bias + BatchNorm(eval) into per-channel f32 scale/bias.
    inv_std = 1.0 / jnp.sqrt(bn_var.astype(jnp.float32) + eps)
    scale = bn_gamma.astype(jnp.float32) * inv_std
    bias = bn_beta.astype(jnp.float32) + scale * (
        conv_b.astype(jnp.float32) - bn_mean.astype(jnp.float32))
    scale = jnp.pad(scale, (0, oc_pad - oc)).reshape(1, oc_pad)
    bias = jnp.pad(bias, (0, oc_pad - oc)).reshape(1, oc_pad)

    # ---- tiling --------------------------------------------------------------
    # K tile: keep K whole when small; otherwise 512-wide tiles with zero-pad
    # so the reduction never folds in unmasked garbage.
    if k <= max_tile_k:
        tile_k = k
    else:
        tile_k = max_tile_k
        k_pad = _round_up(k, tile_k)
        if k_pad != k:
            x_col = jnp.pad(x_col, ((0, 0), (0, k_pad - k)))
            w_mat = jnp.pad(w_mat, ((0, k_pad - k), (0, 0)))
            k = k_pad

    # M tile: big blocks amortize per-step overhead; keep >= 2 parallel steps
    # (v7x has 2 TensorCores) and never a block far larger than M itself.
    tile_m_eff = min(tile_m, _round_up(m, 8))
    if m >= 2 * 128 and pl.cdiv(m, tile_m_eff) < 2:
        tile_m_eff = _round_up(pl.cdiv(m, 2), 128)

    grid = (pl.cdiv(m, tile_m_eff), k // tile_k)

    out = pl.pallas_call(
        _matmul_bn_relu_kernel,
        out_shape=jax.ShapeDtypeStruct((m, oc_pad), x.dtype),
        grid_spec=pltpu.PrefetchScalarGridSpec(
            num_scalar_prefetch=0,
            grid=grid,
            in_specs=[
                pl.BlockSpec((tile_m_eff, tile_k), lambda i, ki: (i, ki)),  # patches
                pl.BlockSpec((tile_k, oc_pad), lambda i, ki: (ki, 0)),      # weights
                pl.BlockSpec((1, oc_pad), lambda i, ki: (0, 0)),            # BN scale
                pl.BlockSpec((1, oc_pad), lambda i, ki: (0, 0)),            # BN bias
            ],
            out_specs=pl.BlockSpec((tile_m_eff, oc_pad), lambda i, ki: (i, 0)),
            scratch_shapes=[pltpu.VMEM((tile_m_eff, oc_pad), jnp.float32)],
        ),
        compiler_params=pltpu.CompilerParams(
            dimension_semantics=("parallel", "arbitrary"),
            vmem_limit_bytes=32 * 1024 * 1024,
        ),
    )(x_col, w_mat, scale, bias)

    out = out[:, :oc]                                          # drop OC lane pad
    out = out.reshape(n, oh, ow, oc).transpose(0, 3, 1, 2)     # NHWC -> NCHW
    return out


# ---------------------------------------------------------------------------
# Reference (pure JAX) for sanity check. Operands quantized to bf16 to mirror
# the kernel's MXU inputs; accumulation and BN epilogue in f32.
# ---------------------------------------------------------------------------
def _reference(x, conv_w, conv_b, bn_gamma, bn_beta, bn_mean, bn_var,
               stride, padding, eps=1e-5):
    y = jax.lax.conv_general_dilated(
        x.astype(jnp.bfloat16), conv_w.astype(jnp.bfloat16),
        window_strides=(stride, stride),
        padding=((padding, padding), (padding, padding)),
        dimension_numbers=("NCHW", "OIHW", "NCHW"),
        preferred_element_type=jnp.float32,
    )
    y = y + conv_b.reshape(1, -1, 1, 1)
    inv_std = 1.0 / jnp.sqrt(bn_var + eps)
    y = (y - bn_mean.reshape(1, -1, 1, 1)) * (bn_gamma * inv_std).reshape(1, -1, 1, 1) \
        + bn_beta.reshape(1, -1, 1, 1)
    return jnp.maximum(y, 0.0)


if __name__ == "__main__":
    key = jax.random.PRNGKey(0)
    k_x, k_w, k_b, k_g, k_beta = jax.random.split(key, 5)

    # ConvBlock(in_channels=4, out_channels=8, kernel_size=3, stride=1, padding=1)
    N, C, H, W = 2, 4, 16, 16
    OC, KH, KW = 8, 3, 3
    stride, padding = 1, 1

    x = jax.random.normal(k_x, (N, C, H, W), dtype=jnp.float32)
    conv_w = jax.random.normal(k_w, (OC, C, KH, KW), dtype=jnp.float32) * 0.1
    conv_b = jax.random.normal(k_b, (OC,), dtype=jnp.float32) * 0.1
    # BatchNorm2d default-initialized params / running stats (eval mode)
    bn_gamma = jnp.ones((OC,), jnp.float32) + 0.05 * jax.random.normal(k_g, (OC,))
    bn_beta = 0.05 * jax.random.normal(k_beta, (OC,), dtype=jnp.float32)
    bn_mean = jnp.zeros((OC,), jnp.float32)
    bn_var = jnp.ones((OC,), jnp.float32)

    out = conv_block_forward(x, conv_w, conv_b, bn_gamma, bn_beta, bn_mean,
                             bn_var, stride=stride, padding=padding)
    out = jax.block_until_ready(out)

    ref = _reference(x, conv_w, conv_b, bn_gamma, bn_beta, bn_mean, bn_var,
                     stride, padding)
    np.testing.assert_allclose(np.asarray(out), np.asarray(ref),
                               rtol=1e-2, atol=1e-2)
    print("KERNEL_OK")
</pallas_src>

<mosaic_0001>
module attributes {stable_mosaic.version = 11 : i64} {
  func.func @_matmul_bn_relu_kernel(%arg0: i32, %arg1: i32, %arg2: memref<256x36xbf16, #tpu.memory_space<vmem>>, %arg3: memref<36x128xbf16, #tpu.memory_space<vmem>>, %arg4: memref<1x128xf32, #tpu.memory_space<vmem>>, %arg5: memref<1x128xf32, #tpu.memory_space<vmem>>, %arg6: memref<256x128xf32, #tpu.memory_space<vmem>>, %arg7: memref<256x128xf32, #tpu.memory_space<vmem>>) attributes {dimension_semantics = [#tpu.dimension_semantics<parallel>, #tpu.dimension_semantics<arbitrary>], iteration_bounds = array<i64: 2, 1>, scalar_prefetch = 0 : i64, scratch_operands = 1 : i64, tpu.core_type = #tpu.core_type<tc>, window_params = [{transform_indices = @transform_0, window_bounds = array<i64: 256, 36>}, {transform_indices = @transform_1, window_bounds = array<i64: 36, 128>}, {pipeline_mode = #tpu.pipeline_mode<synchronous>, transform_indices = @transform_2, window_bounds = array<i64: 1, 128>}, {pipeline_mode = #tpu.pipeline_mode<synchronous>, transform_indices = @transform_3, window_bounds = array<i64: 1, 128>}, {transform_indices = @transform_4, window_bounds = array<i64: 256, 128>}]} {
    %c0_i32 = arith.constant 0 : i32
    %0 = arith.cmpi eq, %arg1, %c0_i32 : i32
    %1 = arith.extui %0 : i1 to i32
    %c0_i32_0 = arith.constant 0 : i32
    %2 = arith.cmpi ne, %1, %c0_i32_0 : i32
    scf.if %2 {
      %cst_10 = arith.constant 0.000000e+00 : f32
      %12 = vector.broadcast %cst_10 : f32 to vector<256x128xf32>
      %c0_11 = arith.constant 0 : index
      %c0_12 = arith.constant 0 : index
      %13 = vector.load %arg7[%c0_11, %c0_12] : memref<256x128xf32, #tpu.memory_space<vmem>>, vector<256x128xf32>
      tpu.vector_store %arg7[%c0_11, %c0_12], %12 {strides = array<i32>} : memref<256x128xf32, #tpu.memory_space<vmem>>, vector<256x128xf32>,
    } else {
    }
    %c0 = arith.constant 0 : index
    %c0_1 = arith.constant 0 : index
    %3 = vector.load %arg7[%c0, %c0_1] : memref<256x128xf32, #tpu.memory_space<vmem>>, vector<256x128xf32>
    %c0_2 = arith.constant 0 : index
    %c0_3 = arith.constant 0 : index
    %4 = vector.load %arg2[%c0_2, %c0_3] : memref<256x36xbf16, #tpu.memory_space<vmem>>, vector<256x36xbf16>
    %c0_4 = arith.constant 0 : index
    %c0_5 = arith.constant 0 : index
    %5 = vector.load %arg3[%c0_4, %c0_5] : memref<36x128xbf16, #tpu.memory_space<vmem>>, vector<36x128xbf16>
    %cst = arith.constant dense<0.000000e+00> : vector<256x128xf32>
    %6 = tpu.matmul %4, %5, %cst {dimension_numbers = #tpu.dot_dimension_numbers<[1], [0], [0], [1], [0, 0, 1, 1], [], []>} : vector<256x36xbf16>, vector<36x128xbf16>, vector<256x128xf32> -> vector<256x128xf32>
    %7 = arith.addf %3, %6 : vector<256x128xf32>
    %c0_6 = arith.constant 0 : index
    %c0_7 = arith.constant 0 : index
    %8 = vector.load %arg7[%c0_6, %c0_7] : memref<256x128xf32, #tpu.memory_space<vmem>>, vector<256x128xf32>
    tpu.vector_store %arg7[%c0_6, %c0_7], %7 {strides = array<i32>} : memref<256x128xf32, #tpu.memory_space<vmem>>, vector<256x128xf32>,
    %c0_i32_8 = arith.constant 0 : i32
    %9 = arith.cmpi eq, %arg1, %c0_i32_8 : i32
    %10 = arith.extui %9 : i1 to i32
    %c0_i32_9 = arith.constant 0 : i32
    %11 = arith.cmpi ne, %10, %c0_i32_9 : i32
    scf.if %11 {
      %c0_10 = arith.constant 0 : index
      %c0_11 = arith.constant 0 : index
      %12 = vector.load %arg7[%c0_10, %c0_11] : memref<256x128xf32, #tpu.memory_space<vmem>>, vector<256x128xf32>
      %c0_12 = arith.constant 0 : index
      %c0_13 = arith.constant 0 : index
      %13 = vector.load %arg4[%c0_12, %c0_13] : memref<1x128xf32, #tpu.memory_space<vmem>>, vector<1x128xf32>
      %14 = vector.broadcast %13 : vector<1x128xf32> to vector<256x128xf32>
      %15 = arith.mulf %12, %14 : vector<256x128xf32>
      %c0_14 = arith.constant 0 : index
      %c0_15 = arith.constant 0 : index
      %16 = vector.load %arg5[%c0_14, %c0_15] : memref<1x128xf32, #tpu.memory_space<vmem>>, vector<1x128xf32>
      %17 = vector.broadcast %16 : vector<1x128xf32> to vector<256x128xf32>
      %18 = arith.addf %15, %17 : vector<256x128xf32>
      %cst_16 = arith.constant 0.000000e+00 : f32
      %19 = vector.broadcast %cst_16 : f32 to vector<256x128xf32>
      %20 = arith.maximumf %18, %19 : vector<256x128xf32>
      %c0_17 = arith.constant 0 : index
      %c0_18 = arith.constant 0 : index
      %21 = vector.load %arg6[%c0_17, %c0_18] : memref<256x128xf32, #tpu.memory_space<vmem>>, vector<256x128xf32>
      tpu.vector_store %arg6[%c0_17, %c0_18], %20 {strides = array<i32>} : memref<256x128xf32, #tpu.memory_space<vmem>>, vector<256x128xf32>,
    } else {
    }
    return
  }
  func.func @transform_0(%arg0: i32, %arg1: i32) -> (i32, i32) {
    %c0_i32 = arith.constant 0 : i32
    return %arg0, %arg1 : i32, i32
  }
  func.func @transform_1(%arg0: i32, %arg1: i32) -> (i32, i32) {
    %c0_i32 = arith.constant 0 : i32
    %c0_i32_0 = arith.constant 0 : i32
    return %arg1, %c0_i32 : i32, i32
  }
  func.func @transform_2(%arg0: i32, %arg1: i32) -> (i32, i32) {
    %c0_i32 = arith.constant 0 : i32
    %c0_i32_0 = arith.constant 0 : i32
    %c0_i32_1 = arith.constant 0 : i32
    return %c0_i32, %c0_i32_0 : i32, i32
  }
  func.func @transform_3(%arg0: i32, %arg1: i32) -> (i32, i32) {
    %c0_i32 = arith.constant 0 : i32
    %c0_i32_0 = arith.constant 0 : i32
    %c0_i32_1 = arith.constant 0 : i32
    return %c0_i32, %c0_i32_0 : i32, i32
  }
  func.func @transform_4(%arg0: i32, %arg1: i32) -> (i32, i32) {
    %c0_i32 = arith.constant 0 : i32
    %c0_i32_0 = arith.constant 0 : i32
    return %arg0, %c0_i32 : i32, i32
  }
}

</mosaic_0001>

<llo_original>
// kernel: conv_block_forward.1
$region0: #{conv_block_forward.1}
  #allocation0 [shape = 'u32[]', space=smem, size = 0x4, offset = 0x4, fixed_abs, tag = 'smem constant byte address 0x4 - core index']
  #allocation1 [shape = 'u32[144,128]{1,0:T(1,128)}', space=vmem, size = 0x12000, scoped, tag = 'internal scratch']
  #allocation2 [shape = 'f32[256,128]{1,0:T(8,128)}', space=vmem, size = 0x20000, scoped, tag = 'scratch operand']
  %s0 = inlined_call_operand.vmem [shape: bf16[512,36], index: 0, kind: input, shape index: {}]
  %s1 = inlined_call_operand.vmem [shape: bf16[36,128], index: 1, kind: input, shape index: {}]
  %s2 = inlined_call_operand.vmem [shape: f32[1,128], index: 2, kind: input, shape index: {}]
  %s3 = inlined_call_operand.vmem [shape: f32[1,128], index: 3, kind: input, shape index: {}]
  %s4 = inlined_call_operand.vmem [shape: f32[512,128], index: 4, kind: output, shape index: {}]
  %s5 = sld [smem:[#allocation0]]
  $region57: #{conv_block_forward.1} parent=0
    _
  %s7 = ssub.s32 1, %s5
  %s8 = scalar_select 0, %s7, %s5
  loop: start=0, step=1, limit=4
  $region2: #{conv_block_forward.1} parent=0 // loop_pre_header
    _
  $region3: #{conv_block_forward.1} parent=0 // loop_header
    %s10 = sphi 0, %s14
    %p11 = scmp.ge.s32.totalorder %s10, 4
    %s17 = sphi 0, %s29
    %s18 = sphi 0, %s25
    %s19 = sphi 0, %s17
    %s20 = sphi 0, %s18
    %s21 = sphi 0, %s19
    %s22 = sphi 0, %s20
    %s34 = sphi 0, %s36
    %s37 = sphi 0, %s34
    %s38 = sphi 0, %s37
    %s54 = sphi 0, %s38
    %s60 = sphi 0, %s62
    %s63 = sphi 0, %s60
    %s64 = sphi 0, %s63
    %s80 = sphi 0, %s64
    %s84 = sphi 0, %s84
    %s86 = sphi 0, %s84
    %s87 = sphi 0, %s86
    %s101 = sphi 0, %s87
    %s105 = sphi 0, %s105
    %s107 = sphi 0, %s105
    %s108 = sphi 0, %s107
    %s122 = sphi 0, %s108
    %s128 = sphi 0, %s130
    %s131 = sphi 0, %s128
    %s132 = sphi 0, %s131
    %s148 = sphi 0, %s132
  $region4: #{conv_block_forward.1} parent=0 // loop_header_branch
    %13 = sbr.rel (%p11) target = $region8
  $region5: #{conv_block_forward.1} parent=0 // loop_body
    %s15 = ssub.s32 %s10, 1
    %s16 = ssub.s32 %s10, 2
    %s23 = sadd.s32 1, %s18
    %p24 = scmp.ge.s32.totalorder %s23, 1
    %s25 = scalar_select %p24, 0, %s23
    %s26 = sadd.s32 1, %s17
    %s27 = scalar_select %p24, %s26, %s17
    %p28 = scmp.ge.s32.totalorder %s27, 2
    %s29 = scalar_select %p28, 0, %s27
    %s30 = ssub.s32 %s17, %s29
    %s31 = ssub.s32 %s18, %s25
    %s32 = sor.u32 %s30, %s31
    %p33 = scmp.eq.s32.totalorder %s32, 0
    %s35 = sadd.s32 %s34, 1
    %s36 = scalar_select %p33, %s34, %s35
    %p39 = pneg %p33
    %p40 = scmp.eq.s32.totalorder %s10, 1
    %p41 = por %p39, %p40
    %p42 = scmp.ne.s32.totalorder %s34, %s37
    %p43 = scmp.eq.s32.totalorder %s10, 0
    %p44 = por %p42, %p43
    %p45 = scmp.ne.s32.totalorder %s34, %s37
    %p46 = scmp.eq.s32.totalorder %s15, 1
    %p47 = por %p45, %p46
    %p48 = scmp.ne.s32.totalorder %s37, %s38
    %p49 = scmp.eq.s32.totalorder %s15, 0
    %p50 = por %p48, %p49
    %p51 = scmp.ne.s32.totalorder %s37, %s38
    %p52 = scmp.eq.s32.totalorder %s16, 1
    %p53 = por %p51, %p52
    %p55 = scmp.ne.s32.totalorder %s38, %s54
    %p56 = scmp.eq.s32.totalorder %s16, 0
    %p57 = por %p55, %p56
    %s58 = ssub.s32 %s18, %s25
    %p59 = scmp.eq.s32.totalorder %s58, 0
    %s61 = sadd.s32 %s60, 1
    %s62 = scalar_select %p59, %s60, %s61
    %p65 = pneg %p59
    %p66 = scmp.eq.s32.totalorder %s10, 1
    %p67 = por %p65, %p66
    %p68 = scmp.ne.s32.totalorder %s60, %s63
    %p69 = scmp.eq.s32.totalorder %s10, 0
    %p70 = por %p68, %p69
    %p71 = scmp.ne.s32.totalorder %s60, %s63
    %p72 = scmp.eq.s32.totalorder %s15, 1
    %p73 = por %p71, %p72
    %p74 = scmp.ne.s32.totalorder %s63, %s64
    %p75 = scmp.eq.s32.totalorder %s15, 0
    %p76 = por %p74, %p75
    %p77 = scmp.ne.s32.totalorder %s63, %s64
    %p78 = scmp.eq.s32.totalorder %s16, 1
    %p79 = por %p77, %p78
    %p81 = scmp.ne.s32.totalorder %s64, %s80
    %p82 = scmp.eq.s32.totalorder %s16, 0
    %p83 = por %p81, %p82
    %s85 = sadd.s32 %s84, 1
    %p88 = scmp.eq.s32.totalorder %s10, 1
    %p89 = scmp.ne.s32.totalorder %s84, %s86
    %p90 = scmp.eq.s32.totalorder %s10, 0
    %p91 = por %p89, %p90
    %p92 = scmp.ne.s32.totalorder %s84, %s86
    %p93 = scmp.eq.s32.totalorder %s15, 1
    %p94 = por %p92, %p93
    %p95 = scmp.ne.s32.totalorder %s86, %s87
    %p96 = scmp.eq.s32.totalorder %s15, 0
    %p97 = por %p95, %p96
    %p98 = scmp.ne.s32.totalorder %s86, %s87
    %p99 = scmp.eq.s32.totalorder %s16, 1
    %p100 = por %p98, %p99
    %p102 = scmp.ne.s32.totalorder %s87, %s101
    %p103 = scmp.eq.s32.totalorder %s16, 0
    %p104 = por %p102, %p103
    %s106 = sadd.s32 %s105, 1
    %p109 = scmp.eq.s32.totalorder %s10, 1
    %p110 = scmp.ne.s32.totalorder %s105, %s107
    %p111 = scmp.eq.s32.totalorder %s10, 0
    %p112 = por %p110, %p111
    %p113 = scmp.ne.s32.totalorder %s105, %s107
    %p114 = scmp.eq.s32.totalorder %s15, 1
    %p115 = por %p113, %p114
    %p116 = scmp.ne.s32.totalorder %s107, %s108
    %p117 = scmp.eq.s32.totalorder %s15, 0
    %p118 = por %p116, %p117
    %p119 = scmp.ne.s32.totalorder %s107, %s108
    %p120 = scmp.eq.s32.totalorder %s16, 1
    %p121 = por %p119, %p120
    %p123 = scmp.ne.s32.totalorder %s108, %s122
    %p124 = scmp.eq.s32.totalorder %s16, 0
    %p125 = por %p123, %p124
    %s126 = ssub.s32 %s17, %s29
    %p127 = scmp.eq.s32.totalorder %s126, 0
    %s129 = sadd.s32 %s128, 1
    %s130 = scalar_select %p127, %s128, %s129
    %p133 = pneg %p127
    %p134 = scmp.eq.s32.totalorder %s10, 1
    %p135 = por %p133, %p134
    %p136 = scmp.ne.s32.totalorder %s128, %s131
    %p137 = scmp.eq.s32.totalorder %s10, 0
    %p138 = por %p136, %p137
    %p139 = scmp.ne.s32.totalorder %s128, %s131
    %p140 = scmp.eq.s32.totalorder %s15, 1
    %p141 = por %p139, %p140
    %p142 = scmp.ne.s32.totalorder %s131, %s132
    %p143 = scmp.eq.s32.totalorder %s15, 0
    %p144 = por %p142, %p143
    %p145 = scmp.ne.s32.totalorder %s131, %s132
    %p146 = scmp.eq.s32.totalorder %s16, 1
    %p147 = por %p145, %p146
    %p149 = scmp.ne.s32.totalorder %s132, %s148
    %p150 = scmp.eq.s32.totalorder %s16, 0
    %p151 = por %p149, %p150
    %p152 = scmp.le.s32.totalorder 1, %s10
    %p153 = scmp.lt.s32.totalorder %s10, 3
    %p154 = pnand %p152, %p153
    %p155 = pneg %p154
    // Predicated region
    $region9: #{conv_block_forward.1} parent=5 // pred_check
      _
    $region10: #{conv_block_forward.1} parent=5 // pred_check_branch
      %157 = sbr.rel (%p154) target = $region12
    $region11: #{conv_block_forward.1} parent=5 // pred_region
      %s158 = ssub.s32 %s10, 1
      // Predicated region
      $region13: #{conv_block_forward.1} parent=11 // pred_check
        %p159 = pneg %p76
      $region14: #{conv_block_forward.1} parent=11 // pred_check_branch
        %161 = sbr.rel (%p159) target = $region16
      $region15: #{conv_block_forward.1} parent=11 // pred_region
        %s162 = smul.u32 5, %s20
        %p163 = scmp.lt.s32.totalorder %s162, 4
        %s164 = scalar_select %p163, %s162, 4
        %s165 = smul.addr %s164, 4
        %s166 = scalar_lea.vmem %s1, %s165
        %s167 = smul.u32 5, %s20
      $region16: #{conv_block_forward.1} parent=11 // pred_fallthru
        _
      // Predicated region
      $region17: #{conv_block_forward.1} parent=11 // pred_check
        %p168 = pneg %p97
      $region18: #{conv_block_forward.1} parent=11 // pred_check_branch
        %170 = sbr.rel (%p168) target = $region20
      $region19: #{conv_block_forward.1} parent=11 // pred_region
        _
      $region20: #{conv_block_forward.1} parent=11 // pred_fallthru
        _
      // Predicated region
      $region21: #{conv_block_forward.1} parent=11 // pred_check
        %p171 = pneg %p118
      $region22: #{conv_block_forward.1} parent=11 // pred_check_branch
        %173 = sbr.rel (%p171) target = $region24
      $region23: #{conv_block_forward.1} parent=11 // pred_region
        _
      $region24: #{conv_block_forward.1} parent=11 // pred_fallthru
        _
    $region12: #{conv_block_forward.1} parent=5 // pred_fallthru
      _
    %p174 = scmp.lt.s32.totalorder %s10, 2
    // Predicated region
    $region25: #{conv_block_forward.1} parent=5 // pred_check
      %p175 = pneg %p174
    $region26: #{conv_block_forward.1} parent=5 // pred_check_branch
      %177 = sbr.rel (%p175) target = $region28
    $region27: #{conv_block_forward.1} parent=5 // pred_region
      // Predicated region
      $region29: #{conv_block_forward.1} parent=27 // pred_check
        %p178 = pneg %p44
      $region30: #{conv_block_forward.1} parent=27 // pred_check_branch
        %180 = sbr.rel (%p178) target = $region32
      $region31: #{conv_block_forward.1} parent=27 // pred_region
        %s181 = smul.u32 32, %s17
        %p182 = scmp.lt.s32.totalorder %s181, 63
        %s183 = scalar_select %p182, %s181, 63
        %p184 = scmp.lt.s32.totalorder %s18, 0
        %s185 = scalar_select %p184, %s18, 0
        %s186 = sadd.s32 %s185, %s183
        %s187 = smul.addr %s186, 4
        %s188 = scalar_lea.vmem %s0, %s187
        %s189 = smul.u32 32, %s17
      $region32: #{conv_block_forward.1} parent=27 // pred_fallthru
        _
    $region28: #{conv_block_forward.1} parent=5 // pred_fallthru
      _
    %p190 = scmp.le.s32.totalorder 1, %s10
    %p191 = scmp.lt.s32.totalorder %s10, 3
    %p192 = pnand %p190, %p191
    %p193 = pneg %p192
    // Predicated region
    $region33: #{conv_block_forward.1} parent=5 // pred_check
      _
    $region34: #{conv_block_forward.1} parent=5 // pred_check_branch
      %195 = sbr.rel (%p192) target = $region36
    $region35: #{conv_block_forward.1} parent=5 // pred_region
      %s196 = ssub.s32 %s10, 1
      %s197 = smul.u32 32, %s19
      %p198 = scmp.lt.s32.totalorder %s197, 63
      %s199 = scalar_select %p198, %s197, 63
      %p200 = scmp.lt.s32.totalorder %s20, 0
      %s201 = scalar_select %p200, %s20, 0
      %s202 = sadd.s32 %s201, %s199
      %s203 = smul.addr %s202, 4
      %s204 = scalar_lea.vmem %s0, %s203
      %p205 = pneg %p50
      %p206 = pneg %p47
      %s207 = smul.u32 5, %s20
      %p208 = scmp.lt.s32.totalorder %s207, 4
      %s209 = scalar_select %p208, %s207, 4
      %s210 = smul.addr %s209, 4
      %s211 = scalar_lea.vmem %s1, %s210
      %p212 = pneg %p76
      %p213 = pneg %p73
      %p214 = pneg %p97
      %p215 = pneg %p94
      %p216 = pneg %p118
      %p217 = pneg %p115
      %p218 = pneg %p144
      %p219 = pneg %p141
      %s220 = smul.u32 32, %s19
      %p221 = scmp.lt.s32.totalorder %s220, 63
      %s222 = scalar_select %p221, %s220, 63
      %s223 = smul.addr %s222, 8
      %s224 = scalar_lea.vmem %s4, %s223
      %s225 = smul.u32 32, %s19
      %p226 = scmp.lt.s32.totalorder %s225, 63
      %s227 = scalar_select %p226, %s225, 63
      %p228 = scmp.lt.s32.totalorder %s20, 0
      %s229 = scalar_select %p228, %s20, 0
      %s230 = sadd.s32 %s229, %s227
      %s231 = smul.addr %s230, 4
      %s232 = scalar_lea.vmem %s0, %s231
      %s233 = smul.u32 32, %s19
      %s234 = smul.u32 5, %s20
      %p235 = scmp.lt.s32.totalorder %s234, 4
      %s236 = scalar_select %p235, %s234, 4
      %s237 = smul.addr %s236, 4
      %s238 = scalar_lea.vmem %s1, %s237
      %s239 = smul.u32 5, %s20
      %s240 = smul.u32 32, %s19
      %p241 = scmp.lt.s32.totalorder %s240, 63
      %s242 = scalar_select %p241, %s240, 63
      %s243 = smul.addr %s242, 8
      %s244 = scalar_lea.vmem %s4, %s243
      %s245 = smul.u32 32, %s19
      %p247 = scmp.eq.s32.totalorder %s20, 0
      // Predicated region
      $region37: #{conv_block_forward.1} parent=35 // pred_check
        %p248 = pneg %p247
      $region38: #{conv_block_forward.1} parent=35 // pred_check_branch
        %250 = sbr.rel (%p248) target = $region40
      $region39: #{conv_block_forward.1} parent=35 // pred_region
        %251 = vst [vmem:[#allocation2] sm:$0xff] 0.0
        %252 = vst [vmem:[#allocation2 + $0x8] sm:$0xff] 0.0
        %253 = vst [vmem:[#allocation2 + $0x10] sm:$0xff] 0.0
        %254 = vst [vmem:[#allocation2 + $0x18] sm:$0xff] 0.0
        %255 = vst [vmem:[#allocation2 + $0x20] sm:$0xff] 0.0
        %256 = vst [vmem:[#allocation2 + $0x28] sm:$0xff] 0.0
        %257 = vst [vmem:[#allocation2 + $0x30] sm:$0xff] 0.0
        %258 = vst [vmem:[#allocation2 + $0x38] sm:$0xff] 0.0
        %259 = vst [vmem:[#allocation2 + $0x40] sm:$0xff] 0.0
        %260 = vst [vmem:[#allocation2 + $0x48] sm:$0xff] 0.0
        %261 = vst [vmem:[#allocation2 + $0x50] sm:$0xff] 0.0
        %262 = vst [vmem:[#allocation2 + $0x58] sm:$0xff] 0.0
        %263 = vst [vmem:[#allocation2 + $0x60] sm:$0xff] 0.0
        %264 = vst [vmem:[#allocation2 + $0x68] sm:$0xff] 0.0
        %265 = vst [vmem:[#allocation2 + $0x70] sm:$0xff] 0.0
        %266 = vst [vmem:[#allocation2 + $0x78] sm:$0xff] 0.0
        %267 = vst [vmem:[#allocation2 + $0x80] sm:$0xff] 0.0
        %268 = vst [vmem:[#allocation2 + $0x88] sm:$0xff] 0.0
        %269 = vst [vmem:[#allocation2 + $0x90] sm:$0xff] 0.0
        %270 = vst [vmem:[#allocation2 + $0x98] sm:$0xff] 0.0
        %271 = vst [vmem:[#allocation2 + $0xa0] sm:$0xff] 0.0
        %272 = vst [vmem:[#allocation2 + $0xa8] sm:$0xff] 0.0
        %273 = vst [vmem:[#allocation2 + $0xb0] sm:$0xff] 0.0
        %274 = vst [vmem:[#allocation2 + $0xb8] sm:$0xff] 0.0
        %275 = vst [vmem:[#allocation2 + $0xc0] sm:$0xff] 0.0
        %276 = vst [vmem:[#allocation2 + $0xc8] sm:$0xff] 0.0
        %277 = vst [vmem:[#allocation2 + $0xd0] sm:$0xff] 0.0
        %278 = vst [vmem:[#allocation2 + $0xd8] sm:$0xff] 0.0
        %279 = vst [vmem:[#allocation2 + $0xe0] sm:$0xff] 0.0
        %280 = vst [vmem:[#allocation2 + $0xe8] sm:$0xff] 0.0
        %281 = vst [vmem:[#allocation2 + $0xf0] sm:$0xff] 0.0
        %282 = vst [vmem:[#allocation2 + $0xf8] sm:$0xff] 0.0
      $region40: #{conv_block_forward.1} parent=35 // pred_fallthru
        _
      %v283 = vld [vmem:[#allocation2] sm:$0xff]
      %v284 = vld [vmem:[#allocation2 + $0x8] sm:$0xff]
      %v285 = vld [vmem:[#allocation2 + $0x10] sm:$0xff]
      %v286 = vld [vmem:[#allocation2 + $0x18] sm:$0xff]
      %v287 = vld [vmem:[#allocation2 + $0x20] sm:$0xff]
      %v288 = vld [vmem:[#allocation2 + $0x28] sm:$0xff]
      %v289 = vld [vmem:[#allocation2 + $0x30] sm:$0xff]
      %v290 = vld [vmem:[#allocation2 + $0x38] sm:$0xff]
      %v291 = vld [vmem:[#allocation2 + $0x40] sm:$0xff]
      %v292 = vld [vmem:[#allocation2 + $0x48] sm:$0xff]
      %v293 = vld [vmem:[#allocation2 + $0x50] sm:$0xff]
      %v294 = vld [vmem:[#allocation2 + $0x58] sm:$0xff]
      %v295 = vld [vmem:[#allocation2 + $0x60] sm:$0xff]
      %v296 = vld [vmem:[#allocation2 + $0x68] sm:$0xff]
      %v297 = vld [vmem:[#allocation2 + $0x70] sm:$0xff]
      %v298 = vld [vmem:[#allocation2 + $0x78] sm:$0xff]
      %v299 = vld [vmem:[#allocation2 + $0x80] sm:$0xff]
      %v300 = vld [vmem:[#allocation2 + $0x88] sm:$0xff]
      %v301 = vld [vmem:[#allocation2 + $0x90] sm:$0xff]
      %v302 = vld [vmem:[#allocation2 + $0x98] sm:$0xff]
      %v303 = vld [vmem:[#allocation2 + $0xa0] sm:$0xff]
      %v304 = vld [vmem:[#allocation2 + $0xa8] sm:$0xff]
      %v305 = vld [vmem:[#allocation2 + $0xb0] sm:$0xff]
      %v306 = vld [vmem:[#allocation2 + $0xb8] sm:$0xff]
      %v307 = vld [vmem:[#allocation2 + $0xc0] sm:$0xff]
      %v308 = vld [vmem:[#allocation2 + $0xc8] sm:$0xff]
      %v309 = vld [vmem:[#allocation2 + $0xd0] sm:$0xff]
      %v310 = vld [vmem:[#allocation2 + $0xd8] sm:$0xff]
      %v311 = vld [vmem:[#allocation2 + $0xe0] sm:$0xff]
      %v312 = vld [vmem:[#allocation2 + $0xe8] sm:$0xff]
      %v313 = vld [vmem:[#allocation2 + $0xf0] sm:$0xff]
      %v314 = vld [vmem:[#allocation2 + $0xf8] sm:$0xff]
      %v315 = vld [vmem:[%s232] sm:$0xf]
      %v316 = vld [vmem:[%s232 + $0x4] sm:$0xf]
      %v317 = vld [vmem:[%s232 + $0x8] sm:$0xf]
      %v318 = vld [vmem:[%s232 + $0xc] sm:$0xf]
      %v319 = vld [vmem:[%s232 + $0x10] sm:$0xf]
      %v320 = vld [vmem:[%s232 + $0x14] sm:$0xf]
      %v321 = vld [vmem:[%s232 + $0x18] sm:$0xf]
      %v322 = vld [vmem:[%s232 + $0x1c] sm:$0xf]
      %v323 = vld [vmem:[%s232 + $0x20] sm:$0xf]
      %v324 = vld [vmem:[%s232 + $0x24] sm:$0xf]
      %v325 = vld [vmem:[%s232 + $0x28] sm:$0xf]
      %v326 = vld [vmem:[%s232 + $0x2c] sm:$0xf]
      %v327 = vld [vmem:[%s232 + $0x30] sm:$0xf]
      %v328 = vld [vmem:[%s232 + $0x34] sm:$0xf]
      %v329 = vld [vmem:[%s232 + $0x38] sm:$0xf]
      %v330 = vld [vmem:[%s232 + $0x3c] sm:$0xf]
      %v331 = vld [vmem:[%s232 + $0x40] sm:$0xf]
      %v332 = vld [vmem:[%s232 + $0x44] sm:$0xf]
      %v333 = vld [vmem:[%s232 + $0x48] sm:$0xf]
      %v334 = vld [vmem:[%s232 + $0x4c] sm:$0xf]
      %v335 = vld [vmem:[%s232 + $0x50] sm:$0xf]
      %v336 = vld [vmem:[%s232 + $0x54] sm:$0xf]
      %v337 = vld [vmem:[%s232 + $0x58] sm:$0xf]
      %v338 = vld [vmem:[%s232 + $0x5c] sm:$0xf]
      %v339 = vld [vmem:[%s232 + $0x60] sm:$0xf]
      %v340 = vld [vmem:[%s232 + $0x64] sm:$0xf]
      %v341 = vld [vmem:[%s232 + $0x68] sm:$0xf]
      %v342 = vld [vmem:[%s232 + $0x6c] sm:$0xf]
      %v343 = vld [vmem:[%s232 + $0x70] sm:$0xf]
      %v344 = vld [vmem:[%s232 + $0x74] sm:$0xf]
      %v345 = vld [vmem:[%s232 + $0x78] sm:$0xf]
      %v346 = vld [vmem:[%s232 + $0x7c] sm:$0xf]
      %v347 = vld [vmem:[%s238] sm:$0xf]
      %v348 = vld [vmem:[%s238 + $0x4] sm:$0xf]
      %v349 = vld [vmem:[%s238 + $0x8] sm:$0xf]
      %v350 = vld [vmem:[%s238 + $0xc] sm:$0xf]
      %v351 = vld [vmem:[%s238 + $0x10] sm:$0x3]
      %v384 = vunpack.c.l.b16 %v315
      %v385 = vunpack.c.l.b16 %v316
      %v386 = vunpack.c.l.b16 %v317
      %v387 = vunpack.c.l.b16 %v318
      %v388 = vunpack.c.l.b16 %v319
      %v389 = vunpack.c.l.b16 %v320
      %v390 = vunpack.c.l.b16 %v321
      %v391 = vunpack.c.l.b16 %v322
      %v392 = vunpack.c.l.b16 %v323
      %v393 = vunpack.c.l.b16 %v324
      %v394 = vunpack.c.l.b16 %v325
      %v395 = vunpack.c.l.b16 %v326
      %v396 = vunpack.c.l.b16 %v327
      %v397 = vunpack.c.l.b16 %v328
      %v398 = vunpack.c.l.b16 %v329
      %v399 = vunpack.c.l.b16 %v330
      %v400 = vunpack.c.l.b16 %v331
      %v401 = vunpack.c.l.b16 %v332
      %v402 = vunpack.c.l.b16 %v333
      %v403 = vunpack.c.l.b16 %v334
      %v404 = vunpack.c.l.b16 %v335
      %v405 = vunpack.c.l.b16 %v336
      %v406 = vunpack.c.l.b16 %v337
      %v407 = vunpack.c.l.b16 %v338
      %v408 = vunpack.c.l.b16 %v339
      %v409 = vunpack.c.l.b16 %v340
      %v410 = vunpack.c.l.b16 %v341
      %v411 = vunpack.c.l.b16 %v342
      %v412 = vunpack.c.l.b16 %v343
      %v413 = vunpack.c.l.b16 %v344
      %v414 = vunpack.c.l.b16 %v345
      %v415 = vunpack.c.l.b16 %v346
      %v416 = vpack.c.b16 %v385, %v384
      %v417 = vpack.c.b16 %v387, %v386
      %v418 = vpack.c.b16 %v389, %v388
      %v419 = vpack.c.b16 %v391, %v390
      %v420 = vpack.c.b16 %v393, %v392
      %v421 = vpack.c.b16 %v395, %v394
      %v422 = vpack.c.b16 %v397, %v396
      %v423 = vpack.c.b16 %v399, %v398
      %v424 = vpack.c.b16 %v401, %v400
      %v425 = vpack.c.b16 %v403, %v402
      %v426 = vpack.c.b16 %v405, %v404
      %v427 = vpack.c.b16 %v407, %v406
      %v428 = vpack.c.b16 %v409, %v408
      %v429 = vpack.c.b16 %v411, %v410
      %v430 = vpack.c.b16 %v413, %v412
      %v431 = vpack.c.b16 %v415, %v414
      %v437 = vunpack.c.l.b16 %v347
      %v438 = vunpack.c.l.b16 %v348
      %v439 = vunpack.c.l.b16 %v349
      %v440 = vunpack.c.l.b16 %v350
      %v441 = vunpack.c.l.b16 %v351
      %v442 = vpack.c.b16 %v438, %v437
      %v443 = vpack.c.b16 %v440, %v439
      %v444 = vpack.c.b16 %v441, %v441
      %vm447 = vcmask 293888
      %v449 = vsel %vm447, %v416, 0
      %v452 = vsel %vm447, %v417, 0
      %v455 = vsel %vm447, %v418, 0
      %v458 = vsel %vm447, %v419, 0
      %v461 = vsel %vm447, %v420, 0
      %v464 = vsel %vm447, %v421, 0
      %v467 = vsel %vm447, %v422, 0
      %v470 = vsel %vm447, %v423, 0
      %v473 = vsel %vm447, %v424, 0
      %v476 = vsel %vm447, %v425, 0
      %v479 = vsel %vm447, %v426, 0
      %v482 = vsel %vm447, %v427, 0
      %v485 = vsel %vm447, %v428, 0
      %v488 = vsel %vm447, %v429, 0
      %v491 = vsel %vm447, %v430, 0
      %v494 = vsel %vm447, %v431, 0
      %vm496 = vcmask 1041408
      %v498 = vsel %vm496, %v444, 0
      %500 = vmatprep.subr.bf16.mxu0 0
      %501 = vmatpush1.bf16.msra.mxu0 %v442
      %502 = vmatprep.subr.bf16.mxu0 0
      %503 = vmatpush1.bf16.msra.mxu0 %v443
      %504 = vmatprep.subr.bf16.mxu0 0
      %505 = vmatpush1.bf16.msra.mxu0 %v498
      %506 = vmatprep.subr.bf16.mxu0 0
      %507 = vmatpush1.bf16.msra.mxu0 0
      %508 = vmatprep.subr.bf16.mxu0 0
      %509 = vmatpush1.bf16.msra.mxu0 0
      %510 = vmatprep.subr.bf16.mxu0 0
      %511 = vmatpush1.bf16.msra.mxu0 0
      %512 = vmatprep.subr.bf16.mxu0 0
      %513 = vmatpush1.bf16.msra.mxu0 0
      %514 = vmatprep.subr.bf16.mxu0 0
      %515 = vmatpush1.bf16.msra.mxu0 0
      %516 = vmatprep.subr.bf16.mxu0 0
      %517 = vmatpush1.bf16.msra.mxu0 0
      %518 = vmatprep.subr.bf16.mxu0 0
      %519 = vmatpush1.bf16.msra.mxu0 0
      %520 = vmatprep.subr.bf16.mxu0 0
      %521 = vmatpush1.bf16.msra.mxu0 0
      %522 = vmatprep.subr.bf16.mxu0 0
      %523 = vmatpush1.bf16.msra.mxu0 0
      %524 = vmatprep.subr.bf16.mxu0 0
      %525 = vmatpush1.bf16.msra.mxu0 0
      %526 = vmatprep.subr.bf16.mxu0 0
      %527 = vmatpush1.bf16.msra.mxu0 0
      %528 = vmatprep.subr.bf16.mxu0 0
      %529 = vmatpush1.bf16.msra.mxu0 0
      %530 = vmatprep.subr.bf16.mxu0 0
      %531 = vmatpush1.bf16.msra.mxu0 0
      %532 = vmatprep.mubr.bf16.mxu0 0
      %533 = vmatmul.mubr.bf16.gmra.mrb[0].mxu0 %v449
      %v534 = vpop.f32.mrb[0].mxu0
      %v535 = vadd.f32 0.0, %v534
      %v536 = vpop.f32.mrb[0].mxu0
      %v537 = vpop.f32.mrb[0].mxu0
      %v538 = vadd.f32 0.0, %v537
      %v539 = vpop.f32.mrb[0].mxu0
      %540 = vmatprep.mubr.bf16.mxu0 0
      %541 = vmatmul.mubr.bf16.gmra.mrb[0].mxu0 %v452
      %v542 = vpop.f32.mrb[0].mxu0
      %v543 = vadd.f32 0.0, %v542
      %v544 = vpop.f32.mrb[0].mxu0
      %v545 = vpop.f32.mrb[0].mxu0
      %v546 = vadd.f32 0.0, %v545
      %v547 = vpop.f32.mrb[0].mxu0
      %548 = vmatprep.mubr.bf16.mxu0 0
      %549 = vmatmul.mubr.bf16.gmra.mrb[0].mxu0 %v455
      %v550 = vpop.f32.mrb[0].mxu0
      %v551 = vadd.f32 0.0, %v550
      %v552 = vpop.f32.mrb[0].mxu0
      %v553 = vpop.f32.mrb[0].mxu0
      %v554 = vadd.f32 0.0, %v553
      %v555 = vpop.f32.mrb[0].mxu0
      %556 = vmatprep.mubr.bf16.mxu0 0
      %557 = vmatmul.mubr.bf16.gmra.mrb[0].mxu0 %v458
      %v558 = vpop.f32.mrb[0].mxu0
      %v559 = vadd.f32 0.0, %v558
      %v560 = vpop.f32.mrb[0].mxu0
      %v561 = vpop.f32.mrb[0].mxu0
      %v562 = vadd.f32 0.0, %v561
      %v563 = vpop.f32.mrb[0].mxu0
      %564 = vmatprep.mubr.bf16.mxu0 0
      %565 = vmatmul.mubr.bf16.gmra.mrb[0].mxu0 %v461
      %v566 = vpop.f32.mrb[0].mxu0
      %v567 = vadd.f32 0.0, %v566
      %v568 = vpop.f32.mrb[0].mxu0
      %v569 = vpop.f32.mrb[0].mxu0
      %v570 = vadd.f32 0.0, %v569
      %v571 = vpop.f32.mrb[0].mxu0
      %572 = vmatprep.mubr.bf16.mxu0 0
      %573 = vmatmul.mubr.bf16.gmra.mrb[0].mxu0 %v464
      %v574 = vpop.f32.mrb[0].mxu0
      %v575 = vadd.f32 0.0, %v574
      %v576 = vpop.f32.mrb[0].mxu0
      %v577 = vpop.f32.mrb[0].mxu0
      %v578 = vadd.f32 0.0, %v577
      %v579 = vpop.f32.mrb[0].mxu0
      %580 = vmatprep.mubr.bf16.mxu0 0
      %581 = vmatmul.mubr.bf16.gmra.mrb[0].mxu0 %v467
      %v582 = vpop.f32.mrb[0].mxu0
      %v583 = vadd.f32 0.0, %v582
      %v584 = vpop.f32.mrb[0].mxu0
      %v585 = vpop.f32.mrb[0].mxu0
      %v586 = vadd.f32 0.0, %v585
      %v587 = vpop.f32.mrb[0].mxu0
      %588 = vmatprep.mubr.bf16.mxu0 0
      %589 = vmatmul.mubr.bf16.gmra.mrb[0].mxu0 %v470
      %v590 = vpop.f32.mrb[0].mxu0
      %v591 = vadd.f32 0.0, %v590
      %v592 = vpop.f32.mrb[0].mxu0
      %v593 = vpop.f32.mrb[0].mxu0
      %v594 = vadd.f32 0.0, %v593
      %v595 = vpop.f32.mrb[0].mxu0
      %596 = vmatprep.mubr.bf16.mxu0 0
      %597 = vmatmul.mubr.bf16.gmra.mrb[0].mxu0 %v473
      %v598 = vpop.f32.mrb[0].mxu0
      %v599 = vadd.f32 0.0, %v598
      %v600 = vpop.f32.mrb[0].mxu0
      %v601 = vpop.f32.mrb[0].mxu0
      %v602 = vadd.f32 0.0, %v601
      %v603 = vpop.f32.mrb[0].mxu0
      %604 = vmatprep.mubr.bf16.mxu0 0
      %605 = vmatmul.mubr.bf16.gmra.mrb[0].mxu0 %v476
      %v606 = vpop.f32.mrb[0].mxu0
      %v607 = vadd.f32 0.0, %v606
      %v608 = vpop.f32.mrb[0].mxu0
      %v609 = vpop.f32.mrb[0].mxu0
      %v610 = vadd.f32 0.0, %v609
      %v611 = vpop.f32.mrb[0].mxu0
      %612 = vmatprep.mubr.bf16.mxu0 0
      %613 = vmatmul.mubr.bf16.gmra.mrb[0].mxu0 %v479
      %v614 = vpop.f32.mrb[0].mxu0
      %v615 = vadd.f32 0.0, %v614
      %v616 = vpop.f32.mrb[0].mxu0
      %v617 = vpop.f32.mrb[0].mxu0
      %v618 = vadd.f32 0.0, %v617
      %v619 = vpop.f32.mrb[0].mxu0
      %620 = vmatprep.mubr.bf16.mxu0 0
      %621 = vmatmul.mubr.bf16.gmra.mrb[0].mxu0 %v482
      %v622 = vpop.f32.mrb[0].mxu0
      %v623 = vadd.f32 0.0, %v622
      %v624 = vpop.f32.mrb[0].mxu0
      %v625 = vpop.f32.mrb[0].mxu0
      %v626 = vadd.f32 0.0, %v625
      %v627 = vpop.f32.mrb[0].mxu0
      %628 = vmatprep.mubr.bf16.mxu0 0
      %629 = vmatmul.mubr.bf16.gmra.mrb[0].mxu0 %v485
      %v630 = vpop.f32.mrb[0].mxu0
      %v631 = vadd.f32 0.0, %v630
      %v632 = vpop.f32.mrb[0].mxu0
      %v633 = vpop.f32.mrb[0].mxu0
      %v634 = vadd.f32 0.0, %v633
      %v635 = vpop.f32.mrb[0].mxu0
      %636 = vmatprep.mubr.bf16.mxu0 0
      %637 = vmatmul.mubr.bf16.gmra.mrb[0].mxu0 %v488
      %v638 = vpop.f32.mrb[0].mxu0
      %v639 = vadd.f32 0.0, %v638
      %v640 = vpop.f32.mrb[0].mxu0
      %v641 = vpop.f32.mrb[0].mxu0
      %v642 = vadd.f32 0.0, %v641
      %v643 = vpop.f32.mrb[0].mxu0
      %644 = vmatprep.mubr.bf16.mxu0 0
      %645 = vmatmul.mubr.bf16.gmra.mrb[0].mxu0 %v491
      %v646 = vpop.f32.mrb[0].mxu0
      %v647 = vadd.f32 0.0, %v646
      %v648 = vpop.f32.mrb[0].mxu0
      %v649 = vpop.f32.mrb[0].mxu0
      %v650 = vadd.f32 0.0, %v649
      %v651 = vpop.f32.mrb[0].mxu0
      %652 = vmatprep.mubr.bf16.mxu0 0
      %653 = vmatmul.mubr.bf16.gmra.mrb[0].mxu0 %v494
      %v654 = vpop.f32.mrb[0].mxu0
      %v655 = vadd.f32 0.0, %v654
      %v656 = vpop.f32.mrb[0].mxu0
      %v657 = vpop.f32.mrb[0].mxu0
      %v658 = vadd.f32 0.0, %v657
      %v659 = vpop.f32.mrb[0].mxu0
      %660 = vdwg.mxu0
      %v661 = vadd.f32 %v283, %v535
      %v662 = vadd.f32 %v284, %v538
      %v663 = vadd.f32 %v285, %v543
      %v664 = vadd.f32 %v286, %v546
      %v665 = vadd.f32 %v287, %v551
      %v666 = vadd.f32 %v288, %v554
      %v667 = vadd.f32 %v289, %v559
      %v668 = vadd.f32 %v290, %v562
      %v669 = vadd.f32 %v291, %v567
      %v670 = vadd.f32 %v292, %v570
      %v671 = vadd.f32 %v293, %v575
      %v672 = vadd.f32 %v294, %v578
      %v673 = vadd.f32 %v295, %v583
      %v674 = vadd.f32 %v296, %v586
      %v675 = vadd.f32 %v297, %v591
      %v676 = vadd.f32 %v298, %v594
      %v677 = vadd.f32 %v299, %v599
      %v678 = vadd.f32 %v300, %v602
      %v679 = vadd.f32 %v301, %v607
      %v680 = vadd.f32 %v302, %v610
      %v681 = vadd.f32 %v303, %v615
      %v682 = vadd.f32 %v304, %v618
      %v683 = vadd.f32 %v305, %v623
      %v684 = vadd.f32 %v306, %v626
      %v685 = vadd.f32 %v307, %v631
      %v686 = vadd.f32 %v308, %v634
      %v687 = vadd.f32 %v309, %v639
      %v688 = vadd.f32 %v310, %v642
      %v689 = vadd.f32 %v311, %v647
      %v690 = vadd.f32 %v312, %v650
      %v691 = vadd.f32 %v313, %v655
      %v692 = vadd.f32 %v314, %v658
      %693 = vst [vmem:[#allocation2] sm:$0xff] %v661
      %694 = vst [vmem:[#allocation2 + $0x8] sm:$0xff] %v662
      %695 = vst [vmem:[#allocation2 + $0x10] sm:$0xff] %v663
      %696 = vst [vmem:[#allocation2 + $0x18] sm:$0xff] %v664
      %697 = vst [vmem:[#allocation2 + $0x20] sm:$0xff] %v665
      %698 = vst [vmem:[#allocation2 + $0x28] sm:$0xff] %v666
      %699 = vst [vmem:[#allocation2 + $0x30] sm:$0xff] %v667
      %700 = vst [vmem:[#allocation2 + $0x38] sm:$0xff] %v668
      %701 = vst [vmem:[#allocation2 + $0x40] sm:$0xff] %v669
      %702 = vst [vmem:[#allocation2 + $0x48] sm:$0xff] %v670
      %703 = vst [vmem:[#allocation2 + $0x50] sm:$0xff] %v671
      %704 = vst [vmem:[#allocation2 + $0x58] sm:$0xff] %v672
      %705 = vst [vmem:[#allocation2 + $0x60] sm:$0xff] %v673
      %706 = vst [vmem:[#allocation2 + $0x68] sm:$0xff] %v674
      %707 = vst [vmem:[#allocation2 + $0x70] sm:$0xff] %v675
      %708 = vst [vmem:[#allocation2 + $0x78] sm:$0xff] %v676
      %709 = vst [vmem:[#allocation2 + $0x80] sm:$0xff] %v677
      %710 = vst [vmem:[#allocation2 + $0x88] sm:$0xff] %v678
      %711 = vst [vmem:[#allocation2 + $0x90] sm:$0xff] %v679
      %712 = vst [vmem:[#allocation2 + $0x98] sm:$0xff] %v680
      %713 = vst [vmem:[#allocation2 + $0xa0] sm:$0xff] %v681
      %714 = vst [vmem:[#allocation2 + $0xa8] sm:$0xff] %v682
      %715 = vst [vmem:[#allocation2 + $0xb0] sm:$0xff] %v683
      %716 = vst [vmem:[#allocation2 + $0xb8] sm:$0xff] %v684
      %717 = vst [vmem:[#allocation2 + $0xc0] sm:$0xff] %v685
      %718 = vst [vmem:[#allocation2 + $0xc8] sm:$0xff] %v686
      %719 = vst [vmem:[#allocation2 + $0xd0] sm:$0xff] %v687
      %720 = vst [vmem:[#allocation2 + $0xd8] sm:$0xff] %v688
      %721 = vst [vmem:[#allocation2 + $0xe0] sm:$0xff] %v689
      %722 = vst [vmem:[#allocation2 + $0xe8] sm:$0xff] %v690
      %723 = vst [vmem:[#allocation2 + $0xf0] sm:$0xff] %v691
      %724 = vst [vmem:[#allocation2 + $0xf8] sm:$0xff] %v692
      // Predicated region
      $region41: #{conv_block_forward.1} parent=35 // pred_check
        %p725 = pneg %p247
      $region42: #{conv_block_forward.1} parent=35 // pred_check_branch
        %727 = sbr.rel (%p725) target = $region44
      $region43: #{conv_block_forward.1} parent=35 // pred_region
        %v728 = vld [vmem:[#allocation2] sm:$0xff]
        %v729 = vld [vmem:[#allocation2 + $0x8] sm:$0xff]
        %v730 = vld [vmem:[#allocation2 + $0x10] sm:$0xff]
        %v731 = vld [vmem:[#allocation2 + $0x18] sm:$0xff]
        %v732 = vld [vmem:[#allocation2 + $0x20] sm:$0xff]
        %v733 = vld [vmem:[#allocation2 + $0x28] sm:$0xff]
        %v734 = vld [vmem:[#allocation2 + $0x30] sm:$0xff]
        %v735 = vld [vmem:[#allocation2 + $0x38] sm:$0xff]
        %v736 = vld [vmem:[#allocation2 + $0x40] sm:$0xff]
        %v737 = vld [vmem:[#allocation2 + $0x48] sm:$0xff]
        %v738 = vld [vmem:[#allocation2 + $0x50] sm:$0xff]
        %v739 = vld [vmem:[#allocation2 + $0x58] sm:$0xff]
        %v740 = vld [vmem:[#allocation2 + $0x60] sm:$0xff]
        %v741 = vld [vmem:[#allocation2 + $0x68] sm:$0xff]
        %v742 = vld [vmem:[#allocation2 + $0x70] sm:$0xff]
        %v743 = vld [vmem:[#allocation2 + $0x78] sm:$0xff]
        %v744 = vld [vmem:[#allocation2 + $0x80] sm:$0xff]
        %v745 = vld [vmem:[#allocation2 + $0x88] sm:$0xff]
        %v746 = vld [vmem:[#allocation2 + $0x90] sm:$0xff]
        %v747 = vld [vmem:[#allocation2 + $0x98] sm:$0xff]
        %v748 = vld [vmem:[#allocation2 + $0xa0] sm:$0xff]
        %v749 = vld [vmem:[#allocation2 + $0xa8] sm:$0xff]
        %v750 = vld [vmem:[#allocation2 + $0xb0] sm:$0xff]
        %v751 = vld [vmem:[#allocation2 + $0xb8] sm:$0xff]
        %v752 = vld [vmem:[#allocation2 + $0xc0] sm:$0xff]
        %v753 = vld [vmem:[#allocation2 + $0xc8] sm:$0xff]
        %v754 = vld [vmem:[#allocation2 + $0xd0] sm:$0xff]
        %v755 = vld [vmem:[#allocation2 + $0xd8] sm:$0xff]
        %v756 = vld [vmem:[#allocation2 + $0xe0] sm:$0xff]
        %v757 = vld [vmem:[#allocation2 + $0xe8] sm:$0xff]
        %v758 = vld [vmem:[#allocation2 + $0xf0] sm:$0xff]
        %v759 = vld [vmem:[#allocation2 + $0xf8] sm:$0xff]
        %v760 = vld [vmem:[%s2] sm:$0x1]
        %v762 = vlaneseq
        %v763 = vshrl.u32 %v762, 7
        %v764 = vsub.s32 0, %v763
        %v765 = vrot.slane %v760, %v764
        %v767 = vmul.f32 %v728, %v765
        %v768 = vmul.f32 %v729, %v765
        %v769 = vmul.f32 %v730, %v765
        %v770 = vmul.f32 %v731, %v765
        %v771 = vmul.f32 %v732, %v765
        %v772 = vmul.f32 %v733, %v765
        %v773 = vmul.f32 %v734, %v765
        %v774 = vmul.f32 %v735, %v765
        %v775 = vmul.f32 %v736, %v765
        %v776 = vmul.f32 %v737, %v765
        %v777 = vmul.f32 %v738, %v765
        %v778 = vmul.f32 %v739, %v765
        %v779 = vmul.f32 %v740, %v765
        %v780 = vmul.f32 %v741, %v765
        %v781 = vmul.f32 %v742, %v765
        %v782 = vmul.f32 %v743, %v765
        %v783 = vmul.f32 %v744, %v765
        %v784 = vmul.f32 %v745, %v765
        %v785 = vmul.f32 %v746, %v765
        %v786 = vmul.f32 %v747, %v765
        %v787 = vmul.f32 %v748, %v765
        %v788 = vmul.f32 %v749, %v765
        %v789 = vmul.f32 %v750, %v765
        %v790 = vmul.f32 %v751, %v765
        %v791 = vmul.f32 %v752, %v765
        %v792 = vmul.f32 %v753, %v765
        %v793 = vmul.f32 %v754, %v765
        %v794 = vmul.f32 %v755, %v765
        %v795 = vmul.f32 %v756, %v765
        %v796 = vmul.f32 %v757, %v765
        %v797 = vmul.f32 %v758, %v765
        %v798 = vmul.f32 %v759, %v765
        %v799 = vld [vmem:[%s3] sm:$0x1]
        %v801 = vlaneseq
        %v802 = vshrl.u32 %v801, 7
        %v803 = vsub.s32 0, %v802
        %v804 = vrot.slane %v799, %v803
        %v806 = vadd.f32 %v767, %v804
        %v807 = vadd.f32 %v768, %v804
        %v808 = vadd.f32 %v769, %v804
        %v809 = vadd.f32 %v770, %v804
        %v810 = vadd.f32 %v771, %v804
        %v811 = vadd.f32 %v772, %v804
        %v812 = vadd.f32 %v773, %v804
        %v813 = vadd.f32 %v774, %v804
        %v814 = vadd.f32 %v775, %v804
        %v815 = vadd.f32 %v776, %v804
        %v816 = vadd.f32 %v777, %v804
        %v817 = vadd.f32 %v778, %v804
        %v818 = vadd.f32 %v779, %v804
        %v819 = vadd.f32 %v780, %v804
        %v820 = vadd.f32 %v781, %v804
        %v821 = vadd.f32 %v782, %v804
        %v822 = vadd.f32 %v783, %v804
        %v823 = vadd.f32 %v784, %v804
        %v824 = vadd.f32 %v785, %v804
        %v825 = vadd.f32 %v786, %v804
        %v826 = vadd.f32 %v787, %v804
        %v827 = vadd.f32 %v788, %v804
        %v828 = vadd.f32 %v789, %v804
        %v829 = vadd.f32 %v790, %v804
        %v830 = vadd.f32 %v791, %v804
        %v831 = vadd.f32 %v792, %v804
        %v832 = vadd.f32 %v793, %v804
        %v833 = vadd.f32 %v794, %v804
        %v834 = vadd.f32 %v795, %v804
        %v835 = vadd.f32 %v796, %v804
        %v836 = vadd.f32 %v797, %v804
        %v837 = vadd.f32 %v798, %v804
        %v838 = vmax.f32 %v806, 0.0
        %v839 = vmax.f32 %v807, 0.0
        %v840 = vmax.f32 %v808, 0.0
        %v841 = vmax.f32 %v809, 0.0
        %v842 = vmax.f32 %v810, 0.0
        %v843 = vmax.f32 %v811, 0.0
        %v844 = vmax.f32 %v812, 0.0
        %v845 = vmax.f32 %v813, 0.0
        %v846 = vmax.f32 %v814, 0.0
        %v847 = vmax.f32 %v815, 0.0
        %v848 = vmax.f32 %v816, 0.0
        %v849 = vmax.f32 %v817, 0.0
        %v850 = vmax.f32 %v818, 0.0
        %v851 = vmax.f32 %v819, 0.0
        %v852 = vmax.f32 %v820, 0.0
        %v853 = vmax.f32 %v821, 0.0
        %v854 = vmax.f32 %v822, 0.0
        %v855 = vmax.f32 %v823, 0.0
        %v856 = vmax.f32 %v824, 0.0
        %v857 = vmax.f32 %v825, 0.0
        %v858 = vmax.f32 %v826, 0.0
        %v859 = vmax.f32 %v827, 0.0
        %v860 = vmax.f32 %v828, 0.0
        %v861 = vmax.f32 %v829, 0.0
        %v862 = vmax.f32 %v830, 0.0
        %v863 = vmax.f32 %v831, 0.0
        %v864 = vmax.f32 %v832, 0.0
        %v865 = vmax.f32 %v833, 0.0
        %v866 = vmax.f32 %v834, 0.0
        %v867 = vmax.f32 %v835, 0.0
        %v868 = vmax.f32 %v836, 0.0
        %v869 = vmax.f32 %v837, 0.0
        %870 = vst [vmem:[%s244] sm:$0xff] %v838
        %871 = vst [vmem:[%s244 + $0x8] sm:$0xff] %v839
        %872 = vst [vmem:[%s244 + $0x10] sm:$0xff] %v840
        %873 = vst [vmem:[%s244 + $0x18] sm:$0xff] %v841
        %874 = vst [vmem:[%s244 + $0x20] sm:$0xff] %v842
        %875 = vst [vmem:[%s244 + $0x28] sm:$0xff] %v843
        %876 = vst [vmem:[%s244 + $0x30] sm:$0xff] %v844
        %877 = vst [vmem:[%s244 + $0x38] sm:$0xff] %v845
        %878 = vst [vmem:[%s244 + $0x40] sm:$0xff] %v846
        %879 = vst [vmem:[%s244 + $0x48] sm:$0xff] %v847
        %880 = vst [vmem:[%s244 + $0x50] sm:$0xff] %v848
        %881 = vst [vmem:[%s244 + $0x58] sm:$0xff] %v849
        %882 = vst [vmem:[%s244 + $0x60] sm:$0xff] %v850
        %883 = vst [vmem:[%s244 + $0x68] sm:$0xff] %v851
        %884 = vst [vmem:[%s244 + $0x70] sm:$0xff] %v852
        %885 = vst [vmem:[%s244 + $0x78] sm:$0xff] %v853
        %886 = vst [vmem:[%s244 + $0x80] sm:$0xff] %v854
        %887 = vst [vmem:[%s244 + $0x88] sm:$0xff] %v855
        %888 = vst [vmem:[%s244 + $0x90] sm:$0xff] %v856
        %889 = vst [vmem:[%s244 + $0x98] sm:$0xff] %v857
        %890 = vst [vmem:[%s244 + $0xa0] sm:$0xff] %v858
        %891 = vst [vmem:[%s244 + $0xa8] sm:$0xff] %v859
        %892 = vst [vmem:[%s244 + $0xb0] sm:$0xff] %v860
        %893 = vst [vmem:[%s244 + $0xb8] sm:$0xff] %v861
        %894 = vst [vmem:[%s244 + $0xc0] sm:$0xff] %v862
        %895 = vst [vmem:[%s244 + $0xc8] sm:$0xff] %v863
        %896 = vst [vmem:[%s244 + $0xd0] sm:$0xff] %v864
        %897 = vst [vmem:[%s244 + $0xd8] sm:$0xff] %v865
        %898 = vst [vmem:[%s244 + $0xe0] sm:$0xff] %v866
        %899 = vst [vmem:[%s244 + $0xe8] sm:$0xff] %v867
        %900 = vst [vmem:[%s244 + $0xf0] sm:$0xff] %v868
        %901 = vst [vmem:[%s244 + $0xf8] sm:$0xff] %v869
      $region44: #{conv_block_forward.1} parent=35 // pred_fallthru
        _
      %s902 = smul.u32 32, %s19
      %p903 = scmp.lt.s32.totalorder %s902, 63
      %s904 = scalar_select %p903, %s902, 63
      %s905 = smul.addr %s904, 8
      %s906 = scalar_lea.vmem %s4, %s905
      // Predicated region
      $region45: #{conv_block_forward.1} parent=35 // pred_check
        %p907 = pneg %p141
      $region46: #{conv_block_forward.1} parent=35 // pred_check_branch
        %909 = sbr.rel (%p907) target = $region48
      $region47: #{conv_block_forward.1} parent=35 // pred_region
        %s910 = smul.u32 32, %s19
      $region48: #{conv_block_forward.1} parent=35 // pred_fallthru
        _
    $region36: #{conv_block_forward.1} parent=5 // pred_fallthru
      _
    %p911 = scmp.le.s32.totalorder 2, %s10
    // Predicated region
    $region49: #{conv_block_forward.1} parent=5 // pred_check
      %p912 = pneg %p911
    $region50: #{conv_block_forward.1} parent=5 // pred_check_branch
      %914 = sbr.rel (%p912) target = $region52
    $region51: #{conv_block_forward.1} parent=5 // pred_region
      %s915 = ssub.s32 %s10, 2
      // Predicated region
      $region53: #{conv_block_forward.1} parent=51 // pred_check
        %p916 = pneg %p147
      $region54: #{conv_block_forward.1} parent=51 // pred_check_branch
        %918 = sbr.rel (%p916) target = $region56
      $region55: #{conv_block_forward.1} parent=51 // pred_region
        %s919 = smul.u32 32, %s21
        %p920 = scmp.lt.s32.totalorder %s919, 63
        %s921 = scalar_select %p920, %s919, 63
        %s922 = smul.addr %s921, 8
        %s923 = scalar_lea.vmem %s4, %s922
      $region56: #{conv_block_forward.1} parent=51 // pred_fallthru
        _
    $region52: #{conv_block_forward.1} parent=5 // pred_fallthru
      _
  $region6: #{conv_block_forward.1} parent=0 // loop_footer
    %s14 = sadd.s32 1, %s10
  $region7: #{conv_block_forward.1} parent=0 // loop_footer_branch
    %9 = sbr.rel target = $region3
  $region8: #{conv_block_forward.1} parent=0 // loop_exit
    _

</llo_original>
